<compile_context>
chip_gen: v5e
topology: v5e:2x2
jax: 0.10.0
libtpu: 0.0.40
codegen_flags: <defaults>
</compile_context>

<pallas_src>
import functools

import jax
import jax.numpy as jnp
from jax.experimental import pallas as pl
from jax.experimental.pallas import tpu as pltpu


def _create_weights(sequence_length, center_size, center_weight, sigma_scale):
    """Deterministic Gaussian-bump weights, matching the PyTorch _create_weights."""
    x = jnp.arange(sequence_length, dtype=jnp.float32)
    mu = sequence_length / 2.0
    sigma = center_size * sigma_scale
    gaussian = jnp.exp(-((x - mu) ** 2) / (2.0 * sigma ** 2))
    gaussian = (gaussian - gaussian.min()) / (gaussian.max() - gaussian.min())
    weights = 1.0 + (center_weight - 1.0) * gaussian
    return weights.astype(jnp.float32)  # (sequence_length,)


def _wmse_kernel(p_ref, t_ref, w_ref, out_ref, *, batch, tm):
    """One grid step: (tm, S) tile -> (8, S) lane-dense partial sum."""
    i = pl.program_id(0)

    p = p_ref[...].astype(jnp.float32)
    t = t_ref[...].astype(jnp.float32)
    d = p - t                                                    # (tm, S) f32

    # Mask rows past the true batch size (only matters for the last partial tile).
    row = i * tm + jax.lax.broadcasted_iota(jnp.int32, d.shape, 0)
    d = jnp.where(row < batch, d, 0.0)

    wsq = d * d * w_ref[...]                                     # (1, S) broadcasts over rows

    # Sublane-only reduction: fold the tm rows down to 8 partial-sum rows.
    s = wsq.shape[1]
    out_ref[...] = jnp.sum(wsq.reshape(tm // 8, 8, s), axis=0)   # (8, S)


def weighted_mse_loss(predictions, targets, weights, *,
                      target_block_bytes=4 << 20,
                      vmem_limit_bytes=48 << 20):
    """predictions/targets: (B, S) f32 or bf16; weights: (S,) f32. Returns scalar f32."""
    B, S = predictions.shape
    assert targets.shape == (B, S)
    assert weights.shape == (S,)

    # Pick the row tile so each input block is ~target_block_bytes (double-buffered
    # by the Pallas pipeline), rounded to a multiple of 8 sublanes, capped at the
    # (8-rounded-up) batch so small inputs become a single grid point.
    rows_target = max(8, target_block_bytes // (S * 4))
    tm = min(rows_target, pl.cdiv(B, 8) * 8)
    tm = max(8, (tm // 8) * 8)
    grid = pl.cdiv(B, tm)

    w2d = weights.reshape(1, S).astype(jnp.float32)
    kernel = functools.partial(_wmse_kernel, batch=B, tm=tm)

    partials = pl.pallas_call(
        kernel,
        out_shape=jax.ShapeDtypeStruct((grid * 8, S), jnp.float32),
        grid_spec=pltpu.PrefetchScalarGridSpec(
            num_scalar_prefetch=0,
            grid=(grid,),
            in_specs=[
                pl.BlockSpec((tm, S), lambda i: (i, 0)),   # predictions tile
                pl.BlockSpec((tm, S), lambda i: (i, 0)),   # targets tile
                pl.BlockSpec((1, S), lambda i: (0, 0)),    # weights (resident)
            ],
            out_specs=pl.BlockSpec((8, S), lambda i: (i, 0)),
        ),
        compiler_params=pltpu.CompilerParams(
            dimension_semantics=("parallel",),             # independent partial sums
            vmem_limit_bytes=vmem_limit_bytes,
        ),
    )(predictions, targets, w2d)

    # Tiny final reduce + mean over all B*S elements (true batch, not the padded grid).
    return jnp.sum(partials) * (1.0 / (B * S))


if __name__ == "__main__":
    # Module config (synthetic, small): sequence_length is the last (lane) dim.
    sequence_length = 128
    center_size = 16
    center_weight = 10.0
    sigma_scale = 0.25
    batch = 16

    weights = _create_weights(sequence_length, center_size, center_weight, sigma_scale)

    key = jax.random.PRNGKey(0)
    kp, kt = jax.random.split(key)
    predictions = jax.random.normal(kp, (batch, sequence_length), dtype=jnp.float32)
    targets = jax.random.normal(kt, (batch, sequence_length), dtype=jnp.float32)

    loss = weighted_mse_loss(predictions, targets, weights)
    jax.block_until_ready(loss)

    # Cross-check against pure-JAX reference (same semantics as the torch module).
    ref = jnp.mean((predictions - targets) ** 2 * weights.reshape(1, -1))
    assert jnp.allclose(loss, ref, rtol=1e-5, atol=1e-5), (loss, ref)

    # Also exercise the partial-tile masking path (batch not divisible by the tile).
    b2 = 13
    p2 = jax.random.normal(kp, (b2, sequence_length), dtype=jnp.float32)
    t2 = jax.random.normal(kt, (b2, sequence_length), dtype=jnp.float32)
    loss2 = weighted_mse_loss(p2, t2, weights)
    ref2 = jnp.mean((p2 - t2) ** 2 * weights.reshape(1, -1))
    assert jnp.allclose(loss2, ref2, rtol=1e-5, atol=1e-5), (loss2, ref2)

    print("KERNEL_OK")
</pallas_src>

<mosaic_0001>
module attributes {stable_mosaic.version = 11 : i64} {
  func.func @_wmse_kernel(%arg0: i32, %arg1: memref<16x128xf32, #tpu.memory_space<vmem>>, %arg2: memref<16x128xf32, #tpu.memory_space<vmem>>, %arg3: memref<1x128xf32, #tpu.memory_space<vmem>>, %arg4: memref<8x128xf32, #tpu.memory_space<vmem>>) attributes {dimension_semantics = [#tpu.dimension_semantics<parallel>], iteration_bounds = array<i64: 1>, scalar_prefetch = 0 : i64, scratch_operands = 0 : i64, tpu.core_type = #tpu.core_type<tc>, window_params = [{transform_indices = @transform_0, window_bounds = array<i64: 16, 128>}, {transform_indices = @transform_1, window_bounds = array<i64: 16, 128>}, {pipeline_mode = #tpu.pipeline_mode<synchronous>, transform_indices = @transform_2, window_bounds = array<i64: 1, 128>}, {transform_indices = @transform_3, window_bounds = array<i64: 8, 128>}]} {
    %c0 = arith.constant 0 : index
    %c0_0 = arith.constant 0 : index
    %0 = vector.load %arg1[%c0, %c0_0] : memref<16x128xf32, #tpu.memory_space<vmem>>, vector<16x128xf32>
    %c0_1 = arith.constant 0 : index
    %c0_2 = arith.constant 0 : index
    %1 = vector.load %arg2[%c0_1, %c0_2] : memref<16x128xf32, #tpu.memory_space<vmem>>, vector<16x128xf32>
    %2 = arith.subf %0, %1 : vector<16x128xf32>
    %c16_i32 = arith.constant 16 : i32
    %3 = arith.muli %arg0, %c16_i32 : i32
    %4 = tpu.iota {dimensions = array<i32: 0>} : vector<16x128xi32>
    %5 = vector.broadcast %3 : i32 to vector<16x128xi32>
    %6 = arith.addi %5, %4 : vector<16x128xi32>
    %c16_i32_3 = arith.constant 16 : i32
    %7 = vector.broadcast %c16_i32_3 : i32 to vector<16x128xi32>
    %8 = arith.cmpi slt, %6, %7 : vector<16x128xi32>
    %cst = arith.constant 0.000000e+00 : f32
    %9 = vector.broadcast %cst : f32 to vector<16x128xf32>
    %10 = arith.select %8, %2, %9 : vector<16x128xi1>, vector<16x128xf32>
    %11 = arith.mulf %10, %10 : vector<16x128xf32>
    %c0_4 = arith.constant 0 : index
    %c0_5 = arith.constant 0 : index
    %12 = vector.load %arg3[%c0_4, %c0_5] : memref<1x128xf32, #tpu.memory_space<vmem>>, vector<1x128xf32>
    %13 = vector.broadcast %12 : vector<1x128xf32> to vector<16x128xf32>
    %14 = arith.mulf %11, %13 : vector<16x128xf32>
    %15 = vector.shape_cast %14 : vector<16x128xf32> to vector<2x8x128xf32>
    %cst_6 = arith.constant dense<0.000000e+00> : vector<8x128xf32>
    %16 = vector.multi_reduction <add>, %15, %cst_6 [0] : vector<2x8x128xf32> to vector<8x128xf32>
    %c0_7 = arith.constant 0 : index
    %c0_8 = arith.constant 0 : index
    %17 = vector.load %arg4[%c0_7, %c0_8] : memref<8x128xf32, #tpu.memory_space<vmem>>, vector<8x128xf32>
    tpu.vector_store %arg4[%c0_7, %c0_8], %16 {strides = array<i32>} : memref<8x128xf32, #tpu.memory_space<vmem>>, vector<8x128xf32>,
    return
  }
  func.func @transform_0(%arg0: i32) -> (i32, i32) {
    %c0_i32 = arith.constant 0 : i32
    %c0_i32_0 = arith.constant 0 : i32
    return %arg0, %c0_i32 : i32, i32
  }
  func.func @transform_1(%arg0: i32) -> (i32, i32) {
    %c0_i32 = arith.constant 0 : i32
    %c0_i32_0 = arith.constant 0 : i32
    return %arg0, %c0_i32 : i32, i32
  }
  func.func @transform_2(%arg0: i32) -> (i32, i32) {
    %c0_i32 = arith.constant 0 : i32
    %c0_i32_0 = arith.constant 0 : i32
    %c0_i32_1 = arith.constant 0 : i32
    return %c0_i32, %c0_i32_0 : i32, i32
  }
  func.func @transform_3(%arg0: i32) -> (i32, i32) {
    %c0_i32 = arith.constant 0 : i32
    %c0_i32_0 = arith.constant 0 : i32
    return %arg0, %c0_i32 : i32, i32
  }
}

</mosaic_0001>

<llo_original>
// kernel: tpu_custom_call.1
$region0: #{tpu_custom_call.1}
  #allocation0 [shape = 'u32[]', space=smem, size = 0x4, offset = 0x4, fixed_abs, tag = 'smem constant byte address 0x4 - core index']
  #allocation1 [shape = 'u32[72,128]{1,0:T(1,128)}', space=vmem, size = 0x9000, scoped, tag = 'internal scratch']
  %s0 = inlined_call_operand.hbm [shape: f32[16,128], index: 0, kind: input, shape index: {}]
  %s1 = inlined_call_operand.hbm [shape: f32[16,128], index: 1, kind: input, shape index: {}]
  %s2 = inlined_call_operand.vmem [shape: f32[1,128], index: 2, kind: input, shape index: {}]
  %s3 = inlined_call_operand.hbm [shape: f32[8,128], index: 3, kind: output, shape index: {}]
  %s4 = sld [smem:[#allocation0]]
  $region30: #{tpu_custom_call.1} parent=0
    _
  %s6 = ssub.s32 1, %s4
  %s7 = scalar_select 0, %s6, %s4
  $region1: #{tpu_custom_call.1} parent=0
    #allocation2 [shape = 'u8[8192]{0}', space=vmem, size = 0x2000, scoped, tag = 'input window, operand 0, single buffered']
    #allocation3 [shape = 's32[1]{0}', space=sflag, size = 0x4, scoped, tag = 'scoped memory for tpu_custom_call.1']
    #allocation4 [shape = 's32[1]{0}', space=sflag, size = 0x4, scoped, tag = 'scoped memory for tpu_custom_call.1']
    #allocation5 [shape = 'u8[8192]{0}', space=vmem, size = 0x2000, scoped, tag = 'input window, operand 1, single buffered']
    #allocation6 [shape = 's32[1]{0}', space=sflag, size = 0x4, scoped, tag = 'scoped memory for tpu_custom_call.1']
    #allocation7 [shape = 'u8[4096]{0}', space=vmem, size = 0x1000, scoped, tag = 'output window, operand 0, single buffered']
    %8 = vsyncpa [#allocation3], 0
    %9 = vsyncpa [#allocation6], 0
    %10 = vsyncpa [#allocation4], 0
    // Predicated region
    $region2: #{tpu_custom_call.1} parent=1 // pred_check
      _
    $region3: #{tpu_custom_call.1} parent=1 // pred_check_branch
      %12 = sbr.rel (0) target = $region5
    $region4: #{tpu_custom_call.1} parent=1 // pred_region
      %14 = vsyncadd [#allocation3], 0
      %s15 = sshll.u32 %s0, 4
      %s16 = int_to_ptr.hbm [resolvable:$true] %s15
      %s17 = sshll.u32 [#allocation2], 4
      %s18 = int_to_ptr.vmem [resolvable:$true] %s17
      %23 = dma.hbm_to_vmem [thread:$0]  %s16, 256, %s18, [#allocation3], 128, 128, 8
    $region5: #{tpu_custom_call.1} parent=1 // pred_fallthru
      _
    // Predicated region
    $region6: #{tpu_custom_call.1} parent=1 // pred_check
      _
    $region7: #{tpu_custom_call.1} parent=1 // pred_check_branch
      %25 = sbr.rel (0) target = $region9
    $region8: #{tpu_custom_call.1} parent=1 // pred_region
      %27 = vsyncadd [#allocation6], 0
      %s28 = sshll.u32 %s1, 4
      %s29 = int_to_ptr.hbm [resolvable:$true] %s28
      %s30 = sshll.u32 [#allocation5], 4
      %s31 = int_to_ptr.vmem [resolvable:$true] %s30
      %36 = dma.hbm_to_vmem [thread:$0]  %s29, 256, %s31, [#allocation6], 128, 128, 8
    $region9: #{tpu_custom_call.1} parent=1 // pred_fallthru
      _
    // Predicated region
    $region10: #{tpu_custom_call.1} parent=1 // pred_check
      _
    $region11: #{tpu_custom_call.1} parent=1 // pred_check_branch
      %38 = sbr.rel (0) target = $region13
    $region12: #{tpu_custom_call.1} parent=1 // pred_region
      _
    $region13: #{tpu_custom_call.1} parent=1 // pred_fallthru
      _
    // Predicated region
    $region14: #{tpu_custom_call.1} parent=1 // pred_check
      _
    $region15: #{tpu_custom_call.1} parent=1 // pred_check_branch
      %40 = sbr.rel (0) target = $region17
    $region16: #{tpu_custom_call.1} parent=1 // pred_region
      %42 = dma.done [#allocation3], 256
    $region17: #{tpu_custom_call.1} parent=1 // pred_fallthru
      _
    // Predicated region
    $region18: #{tpu_custom_call.1} parent=1 // pred_check
      _
    $region19: #{tpu_custom_call.1} parent=1 // pred_check_branch
      %44 = sbr.rel (0) target = $region21
    $region20: #{tpu_custom_call.1} parent=1 // pred_region
      %46 = dma.done [#allocation6], 256
    $region21: #{tpu_custom_call.1} parent=1 // pred_fallthru
      _
    %v47 = vld [vmem:[#allocation2] sm:$0xff]
    %v48 = vld [vmem:[#allocation2 + $0x8] sm:$0xff]
    %v49 = vld [vmem:[#allocation5] sm:$0xff]
    %v50 = vld [vmem:[#allocation5 + $0x8] sm:$0xff]
    %v51 = vsub.f32 %v47, %v49
    %v52 = vsub.f32 %v48, %v50
    %s53 = smul.u32 0, 16
    %v54 = vlaneseq
    %v55 = vshrl.u32 %v54, 7
    %v56 = vadd.s32 %v55, 8
    %v57 = vstv %s53
    %v58 = vadd.s32 %v57, %v55
    %v59 = vadd.s32 %v57, %v56
    %vm60 = vcmp.lt.s32.totalorder %v58, 16
    %vm61 = vcmp.lt.s32.totalorder %v59, 16
    %v62 = vsel %vm60, %v51, 0.0
    %v63 = vsel %vm61, %v52, 0.0
    %v64 = vmul.f32 %v62, %v62
    %v65 = vmul.f32 %v63, %v63
    %v66 = vld [vmem:[%s2] sm:$0x1]
    %v68 = vperm.slane %v66, 0
    %v70 = vmul.f32 %v64, %v68
    %v71 = vmul.f32 %v65, %v68
    %v72 = vadd.f32 %v70, %v71
    %73 = vst [vmem:[#allocation7] sm:$0xff] %v72
    // Predicated region
    $region22: #{tpu_custom_call.1} parent=1 // pred_check
      _
    $region23: #{tpu_custom_call.1} parent=1 // pred_check_branch
      %75 = sbr.rel (0) target = $region25
    $region24: #{tpu_custom_call.1} parent=1 // pred_region
      %77 = vsyncadd [#allocation4], 0
      %s79 = sshll.u32 [#allocation7], 4
      %s80 = int_to_ptr.vmem [resolvable:$true] %s79
      %s81 = sshll.u32 %s3, 4
      %s82 = int_to_ptr.hbm [resolvable:$true] %s81
      %84 = dma.vmem_to_hbm [thread:$0]  %s80, 128, %s82, [#allocation4]
    $region25: #{tpu_custom_call.1} parent=1 // pred_fallthru
      _
    // Predicated region
    $region26: #{tpu_custom_call.1} parent=1 // pred_check
      _
    $region27: #{tpu_custom_call.1} parent=1 // pred_check_branch
      %86 = sbr.rel (0) target = $region29
    $region28: #{tpu_custom_call.1} parent=1 // pred_region
      %88 = dma.done [#allocation4], 128
    $region29: #{tpu_custom_call.1} parent=1 // pred_fallthru
      _
    %89 = vsyncpa [#allocation3], 1
    %90 = vsyncpa [#allocation6], 1
    %91 = vsyncpa [#allocation4], 1

</llo_original>
